<compile_context>
chip_gen: v7x
topology: tpu7x:2x2x1
jax: 0.10.0
libtpu: 0.0.40
codegen_flags: <defaults>
</compile_context>

<pallas_src>
import functools
import math

import numpy as np
import jax
import jax.numpy as jnp
from jax.experimental import pallas as pl
from jax.experimental.pallas import tpu as pltpu


def _net_kernel(patches_ref, w_ref, pt_ref, out_ref, conv_ref, lhs_ref, *,
                bias, nb, cout_p, sp):
    # patches_ref: (Kp, nb*Sp)        bf16  im2col patches, batch folded into lanes
    # w_ref:       (Cout_p, Kp)       bf16  packed conv weight
    # pt_ref:      (Sp, Pp)           f32   kron(a_h, a_w)^T (serves both pools)
    # out_ref:     (nb*2*Cout_p, Pp)  f32   rows = (sample, branch, channel)
    # conv_ref:    (Cout_p, nb*Sp)    f32   scratch: conv result, batch on lanes
    # lhs_ref:     (nb*2*Cout_p, Sp)  f32   scratch: pooling LHS, batch on sublanes

    # ---- conv2d: ONE im2col matmul for the whole batch block (MXU, bf16->f32) ----
    conv_ref[...] = jnp.dot(w_ref[...], patches_ref[...],
                            preferred_element_type=jnp.float32)

    # ---- shrink / relu + lane -> sublane relayout (tile-aligned copies only) ----
    # Statically unrolled: every slice offset is a multiple of (8, 128), so each
    # iteration is a couple of unmasked vreg loads/stores plus VPU elementwise.
    # nb stays modest (default 64) so program size is bounded; no matmuls and no
    # concatenate inside the loop.
    for i in range(nb):
        band = conv_ref[:, i * sp:(i + 1) * sp]                 # (Cout_p, Sp) f32
        shr = jnp.where(band > bias, band - bias,
                        jnp.where(band < -bias, band + bias, 0.0))
        lhs_ref[(2 * i) * cout_p:(2 * i + 1) * cout_p, :] = shr
        lhs_ref[(2 * i + 1) * cout_p:(2 * i + 2) * cout_p, :] = jnp.maximum(shr, 0.0)

    # ---- both ceil-mode avg-pools: ONE matmul for the whole block (f32) ----
    out_ref[...] = jnp.dot(lhs_ref[...], pt_ref[...],
                           preferred_element_type=jnp.float32)


def _round_up(x, m):
    return (x + m - 1) // m * m


def _pool_matrix(in_size, k, s):
    """1-D averaging matrix reproducing F.avg_pool2d(ceil_mode=True, padding=0)."""
    out = math.ceil((in_size - k) / s) + 1
    if (out - 1) * s >= in_size:   # PyTorch rule: last window must start inside input
        out -= 1
    a = np.zeros((out, in_size), dtype=np.float32)
    for p in range(out):
        start = p * s
        end = min(start + k, in_size)   # padding=0 -> divisor is the clipped window
        a[p, start:end] = 1.0 / (end - start)
    return a


def net_forward(x, conv_weight, pool_size, pool_stride, bias=1.0, batch_block=64):
    n, cin, h, w = x.shape
    cout, cin_w, kh, kw = conv_weight.shape
    assert cin == cin_w
    hout, wout = h - kh + 1, w - kw + 1

    # ---- 1-D pooling matrices on the valid conv grid, embedded into HxW ----
    a_h = _pool_matrix(hout, pool_size, pool_stride)   # (Ph, Hout)
    a_w = _pool_matrix(wout, pool_size, pool_stride)   # (Pw, Wout)
    ph, pw_ = a_h.shape[0], a_w.shape[0]
    a_h_full = np.zeros((ph, h), dtype=np.float32)
    a_h_full[:, :hout] = a_h
    a_w_full = np.zeros((pw_, w), dtype=np.float32)
    a_w_full[:, :wout] = a_w

    # ---- MXU / lane-friendly sizes ----
    k_raw = cin * kh * kw
    kp = _round_up(max(k_raw, 8), 8)           # conv contraction dim (27 -> 32)
    hw = h * w
    sp = _round_up(hw, 128)                    # per-sample spatial lanes (256)
    pp = _round_up(ph * pw_, 128)              # pooled spatial lanes (25 -> 128)
    cout_p = _round_up(cout, 8)                # f32 sublane tile; 8 -> no row waste

    # Batch elements per grid step: large enough to amortize the per-step
    # overhead, while keeping grid >= 2 for N >= 2 (both v7x TensorCores).
    # At nb=64 the double-buffered working set is ~5 MiB (< v5e's 16 MiB
    # default scoped VMEM).
    nb = max(1, min(batch_block, -(-n // 2)))
    n_pad = _round_up(n, nb)

    # ---- im2col on the FULL HxW grid: (Kp, N_pad*Sp), zero padded ----
    # Invalid border positions are never referenced by the pooling matrix.
    # TODO(synk): this slab is ~4x the raw input bytes; a further HBM cut is to
    # move im2col in-kernel (shifted slices of a resident (Cin, nb*H*W) tile).
    xpad = jnp.pad(x, ((0, 0), (0, 0), (0, kh - 1), (0, kw - 1)))
    cols = [xpad[:, :, i:i + h, j:j + w] for i in range(kh) for j in range(kw)]
    patches = jnp.stack(cols, axis=2)                    # (N, Cin, KH*KW, H, W)
    patches = patches.reshape(n, k_raw, hw)
    patches = jnp.pad(patches,
                      ((0, n_pad - n), (0, kp - k_raw), (0, sp - hw)))
    patches = jnp.transpose(patches, (1, 0, 2)).reshape(kp, n_pad * sp)
    patches = patches.astype(jnp.bfloat16)               # halve the input stream

    # ---- packed conv weight (Cout_p, Kp), bf16 ----
    w2d = conv_weight.reshape(cout, k_raw)
    w2d = jnp.pad(w2d, ((0, cout_p - cout), (0, kp - k_raw))).astype(jnp.bfloat16)

    # ---- Kronecker pooling matrix, transposed & zero padded, f32: (Sp, Pp) ----
    p_kron = np.kron(a_h_full, a_w_full)                 # (Ph*Pw, H*W)
    p_t = np.zeros((sp, pp), dtype=np.float32)
    p_t[:hw, :ph * pw_] = p_kron.T
    p_t = jnp.asarray(p_t)

    # TODO(synk): bias is a constructor constant in the module, so it is baked
    # in statically; pass it as an SMEM scalar instead if it varies at runtime.
    kernel = functools.partial(_net_kernel, bias=float(bias), nb=nb,
                               cout_p=cout_p, sp=sp)
    out_shape = jax.ShapeDtypeStruct((n_pad * 2 * cout_p, pp), jnp.float32)

    grid_spec = pltpu.PrefetchScalarGridSpec(
        num_scalar_prefetch=0,
        grid=(n_pad // nb,),
        in_specs=[
            pl.BlockSpec((kp, nb * sp), lambda b: (0, b)),
            pl.BlockSpec((cout_p, kp), lambda b: (0, 0)),
            pl.BlockSpec((sp, pp), lambda b: (0, 0)),
        ],
        out_specs=pl.BlockSpec((nb * 2 * cout_p, pp), lambda b: (b, 0)),
        scratch_shapes=[
            pltpu.VMEM((cout_p, nb * sp), jnp.float32),      # conv result
            pltpu.VMEM((nb * 2 * cout_p, sp), jnp.float32),  # pooling LHS
        ],
    )

    out = pl.pallas_call(
        kernel,
        out_shape=out_shape,
        grid_spec=grid_spec,
        compiler_params=pltpu.CompilerParams(dimension_semantics=("parallel",)),
    )(patches, w2d, p_t)

    # ---- wrapper-side unpack: rows are (sample, branch, channel) ----
    out = out.reshape(n_pad, 2, cout_p, pp)[:n, :, :cout, :ph * pw_]
    out1 = out[:, 0].reshape(n, cout, ph, pw_)     # avg_pool(shrink(conv))
    out2 = out[:, 1].reshape(n, cout, ph, pw_)     # avg_pool(relu(shrink(conv)))
    return out1, out2


if __name__ == "__main__":
    # Small deterministic shapes consistent with the module's forward.
    N, CIN, H, W = 2, 3, 16, 16
    COUT, KH, KW = 8, 3, 3
    POOL_SIZE, POOL_STRIDE = 4, 3
    BIAS = 1.0

    key = jax.random.PRNGKey(0)
    kx, kw_ = jax.random.split(key)
    x = jax.random.uniform(kx, (N, CIN, H, W), dtype=jnp.float32)          # like torch.rand
    conv_weight = jax.random.normal(kw_, (COUT, CIN, KH, KW), dtype=jnp.float32) * 0.1

    out1, out2 = net_forward(x, conv_weight, POOL_SIZE, POOL_STRIDE, bias=BIAS)
    jax.block_until_ready((out1, out2))
    print("KERNEL_OK")
</pallas_src>

<mosaic_0001>
module attributes {stable_mosaic.version = 11 : i64} {
  func.func @_net_kernel(%arg0: i32, %arg1: memref<32x256xbf16, #tpu.memory_space<vmem>>, %arg2: memref<8x32xbf16, #tpu.memory_space<vmem>>, %arg3: memref<256x128xf32, #tpu.memory_space<vmem>>, %arg4: memref<16x128xf32, #tpu.memory_space<vmem>>, %arg5: memref<8x256xf32, #tpu.memory_space<vmem>>, %arg6: memref<16x256xf32, #tpu.memory_space<vmem>>) attributes {dimension_semantics = [#tpu.dimension_semantics<parallel>], iteration_bounds = array<i64: 2>, scalar_prefetch = 0 : i64, scratch_operands = 2 : i64, tpu.core_type = #tpu.core_type<tc>, window_params = [{transform_indices = @transform_0, window_bounds = array<i64: 32, 256>}, {pipeline_mode = #tpu.pipeline_mode<synchronous>, transform_indices = @transform_1, window_bounds = array<i64: 8, 32>}, {pipeline_mode = #tpu.pipeline_mode<synchronous>, transform_indices = @transform_2, window_bounds = array<i64: 256, 128>}, {transform_indices = @transform_3, window_bounds = array<i64: 16, 128>}]} {
    %c0 = arith.constant 0 : index
    %c0_0 = arith.constant 0 : index
    %0 = vector.load %arg2[%c0, %c0_0] : memref<8x32xbf16, #tpu.memory_space<vmem>>, vector<8x32xbf16>
    %c0_1 = arith.constant 0 : index
    %c0_2 = arith.constant 0 : index
    %1 = vector.load %arg1[%c0_1, %c0_2] : memref<32x256xbf16, #tpu.memory_space<vmem>>, vector<32x256xbf16>
    %cst = arith.constant dense<0.000000e+00> : vector<8x256xf32>
    %2 = tpu.matmul %0, %1, %cst {dimension_numbers = #tpu.dot_dimension_numbers<[1], [0], [0], [1], [0, 0, 1, 1], [], []>} : vector<8x32xbf16>, vector<32x256xbf16>, vector<8x256xf32> -> vector<8x256xf32>
    %c0_3 = arith.constant 0 : index
    %c0_4 = arith.constant 0 : index
    %3 = vector.load %arg5[%c0_3, %c0_4] : memref<8x256xf32, #tpu.memory_space<vmem>>, vector<8x256xf32>
    tpu.vector_store %arg5[%c0_3, %c0_4], %2 {strides = array<i32>} : memref<8x256xf32, #tpu.memory_space<vmem>>, vector<8x256xf32>,
    %c0_5 = arith.constant 0 : index
    %c0_6 = arith.constant 0 : index
    %4 = vector.load %arg5[%c0_5, %c0_6] : memref<8x256xf32, #tpu.memory_space<vmem>>, vector<8x256xf32>
    %cst_7 = arith.constant 1.000000e+00 : f32
    %5 = vector.broadcast %cst_7 : f32 to vector<8x256xf32>
    %6 = arith.cmpf ogt, %4, %5 : vector<8x256xf32>
    %cst_8 = arith.constant 1.000000e+00 : f32
    %7 = vector.broadcast %cst_8 : f32 to vector<8x256xf32>
    %8 = arith.subf %4, %7 : vector<8x256xf32>
    %cst_9 = arith.constant -1.000000e+00 : f32
    %9 = vector.broadcast %cst_9 : f32 to vector<8x256xf32>
    %10 = arith.cmpf olt, %4, %9 : vector<8x256xf32>
    %cst_10 = arith.constant 1.000000e+00 : f32
    %11 = vector.broadcast %cst_10 : f32 to vector<8x256xf32>
    %12 = arith.addf %4, %11 : vector<8x256xf32>
    %cst_11 = arith.constant 0.000000e+00 : f32
    %13 = vector.broadcast %cst_11 : f32 to vector<8x256xf32>
    %14 = arith.select %10, %12, %13 : vector<8x256xi1>, vector<8x256xf32>
    %15 = arith.select %6, %8, %14 : vector<8x256xi1>, vector<8x256xf32>
    %c0_12 = arith.constant 0 : index
    %c0_13 = arith.constant 0 : index
    %16 = vector.load %arg6[%c0_12, %c0_13] : memref<16x256xf32, #tpu.memory_space<vmem>>, vector<8x256xf32>
    tpu.vector_store %arg6[%c0_12, %c0_13], %15 {strides = array<i32>} : memref<16x256xf32, #tpu.memory_space<vmem>>, vector<8x256xf32>,
    %cst_14 = arith.constant 0.000000e+00 : f32
    %17 = vector.broadcast %cst_14 : f32 to vector<8x256xf32>
    %18 = arith.maximumf %15, %17 : vector<8x256xf32>
    %c8 = arith.constant 8 : index
    %c0_15 = arith.constant 0 : index
    %19 = vector.load %arg6[%c8, %c0_15] : memref<16x256xf32, #tpu.memory_space<vmem>>, vector<8x256xf32>
    tpu.vector_store %arg6[%c8, %c0_15], %18 {strides = array<i32>} : memref<16x256xf32, #tpu.memory_space<vmem>>, vector<8x256xf32>,
    %c0_16 = arith.constant 0 : index
    %c0_17 = arith.constant 0 : index
    %20 = vector.load %arg6[%c0_16, %c0_17] : memref<16x256xf32, #tpu.memory_space<vmem>>, vector<16x256xf32>
    %c0_18 = arith.constant 0 : index
    %c0_19 = arith.constant 0 : index
    %21 = vector.load %arg3[%c0_18, %c0_19] : memref<256x128xf32, #tpu.memory_space<vmem>>, vector<256x128xf32>
    %cst_20 = arith.constant dense<0.000000e+00> : vector<16x128xf32>
    %22 = tpu.matmul %20, %21, %cst_20 {dimension_numbers = #tpu.dot_dimension_numbers<[1], [0], [0], [1], [0, 0, 1, 1], [], []>} : vector<16x256xf32>, vector<256x128xf32>, vector<16x128xf32> -> vector<16x128xf32>
    %c0_21 = arith.constant 0 : index
    %c0_22 = arith.constant 0 : index
    %23 = vector.load %arg4[%c0_21, %c0_22] : memref<16x128xf32, #tpu.memory_space<vmem>>, vector<16x128xf32>
    tpu.vector_store %arg4[%c0_21, %c0_22], %22 {strides = array<i32>} : memref<16x128xf32, #tpu.memory_space<vmem>>, vector<16x128xf32>,
    return
  }
  func.func @transform_0(%arg0: i32) -> (i32, i32) {
    %c0_i32 = arith.constant 0 : i32
    %c0_i32_0 = arith.constant 0 : i32
    return %c0_i32, %arg0 : i32, i32
  }
  func.func @transform_1(%arg0: i32) -> (i32, i32) {
    %c0_i32 = arith.constant 0 : i32
    %c0_i32_0 = arith.constant 0 : i32
    %c0_i32_1 = arith.constant 0 : i32
    return %c0_i32, %c0_i32_0 : i32, i32
  }
  func.func @transform_2(%arg0: i32) -> (i32, i32) {
    %c0_i32 = arith.constant 0 : i32
    %c0_i32_0 = arith.constant 0 : i32
    %c0_i32_1 = arith.constant 0 : i32
    return %c0_i32, %c0_i32_0 : i32, i32
  }
  func.func @transform_3(%arg0: i32) -> (i32, i32) {
    %c0_i32 = arith.constant 0 : i32
    %c0_i32_0 = arith.constant 0 : i32
    return %arg0, %c0_i32 : i32, i32
  }
}

</mosaic_0001>

<llo_original>
// kernel: tpu_custom_call.1
$region0: #{tpu_custom_call.1}
  #allocation0 [shape = 'u32[]', space=smem, size = 0x4, offset = 0x4, fixed_abs, tag = 'smem constant byte address 0x4 - core index']
  #allocation1 [shape = 'u32[144,128]{1,0:T(1,128)}', space=vmem, size = 0x12000, scoped, tag = 'internal scratch']
  #allocation2 [shape = 'f32[8,256]{1,0:T(8,128)}', space=vmem, size = 0x2000, scoped, tag = 'scratch operand']
  #allocation3 [shape = 'f32[16,256]{1,0:T(8,128)}', space=vmem, size = 0x4000, scoped, tag = 'scratch operand']
  %s0 = inlined_call_operand.hbm [shape: bf16[32,512], index: 0, kind: input, shape index: {}]
  %s1 = inlined_call_operand.hbm [shape: bf16[8,32], index: 1, kind: input, shape index: {}]
  %s2 = inlined_call_operand.hbm [shape: f32[256,128], index: 2, kind: input, shape index: {}]
  %s3 = inlined_call_operand.hbm [shape: f32[32,128], index: 3, kind: output, shape index: {}]
  %s4 = sld [smem:[#allocation0]]
  $region57: #{tpu_custom_call.1} parent=0
    _
  %s6 = ssub.s32 1, %s4
  %s7 = scalar_select 0, %s6, %s4
  $region1: #{tpu_custom_call.1} parent=0
    #allocation4 [shape = 'u8[32768]{0}', space=vmem, size = 0x8000, scoped, tag = 'input window, operand 0']
    #allocation5 [shape = 's32[2]{0}', space=sflag, size = 0x8, scoped, tag = 'scoped memory for tpu_custom_call.1']
    #allocation6 [shape = 's32[2]{0}', space=sflag, size = 0x8, scoped, tag = 'scoped memory for tpu_custom_call.1']
    #allocation7 [shape = 'u8[2048]{0}', space=vmem, size = 0x800, scoped, tag = 'input window, operand 1, single buffered']
    #allocation8 [shape = 's32[1]{0}', space=sflag, size = 0x4, scoped, tag = 'scoped memory for tpu_custom_call.1']
    #allocation9 [shape = 'u8[131072]{0}', space=vmem, size = 0x20000, scoped, tag = 'input window, operand 2, single buffered']
    #allocation10 [shape = 'u8[16384]{0}', space=vmem, size = 0x4000, scoped, tag = 'output window, operand 0']
    %8 = vsyncpa [#allocation5], 0
    %s9 = scalar_lea.sflag [#allocation5], 1
    %10 = vsyncpa %s9, 0
    %11 = vsyncpa [#allocation8], 0
    %12 = vsyncpa [#allocation6], 0
    %s13 = scalar_lea.sflag [#allocation6], 1
    %14 = vsyncpa %s13, 0
    loop: start=0, step=1, limit=4
    $region2: #{tpu_custom_call.1} parent=1 // loop_pre_header
      _
    $region3: #{tpu_custom_call.1} parent=1 // loop_header
      %s16 = sphi 0, %s20
      %p17 = scmp.ge.s32.totalorder %s16, 4
      %s26 = sphi 0, %s28
      %s29 = sphi 0, %s26
      %s30 = sphi 0, %s29
      %s46 = sphi 0, %s30
      %s50 = sphi 0, %s50
      %s52 = sphi 0, %s50
      %s53 = sphi 0, %s52
      %s67 = sphi 0, %s53
      %s71 = sphi 0, %s71
      %s73 = sphi 0, %s71
      %s74 = sphi 0, %s73
      %s88 = sphi 0, %s74
      %s94 = sphi 0, %s96
      %s97 = sphi 0, %s94
      %s98 = sphi 0, %s97
      %s114 = sphi 0, %s98
    $region4: #{tpu_custom_call.1} parent=1 // loop_header_branch
      %19 = sbr.rel (%p17) target = $region8
    $region5: #{tpu_custom_call.1} parent=1 // loop_body
      %s21 = ssub.s32 %s16, 1
      %s22 = ssub.s32 %s16, 2
      %s23 = sadd.s32 %s16, 1
      %s24 = ssub.s32 %s16, %s23
      %p25 = scmp.eq.s32.totalorder %s24, 0
      %s27 = sadd.s32 %s26, 1
      %s28 = scalar_select %p25, %s26, %s27
      %p31 = pneg %p25
      %p32 = scmp.eq.s32.totalorder %s16, 1
      %p33 = por %p31, %p32
      %p34 = scmp.ne.s32.totalorder %s26, %s29
      %p35 = scmp.eq.s32.totalorder %s16, 0
      %p36 = por %p34, %p35
      %p37 = scmp.ne.s32.totalorder %s26, %s29
      %p38 = scmp.eq.s32.totalorder %s21, 1
      %p39 = por %p37, %p38
      %p40 = scmp.ne.s32.totalorder %s29, %s30
      %p41 = scmp.eq.s32.totalorder %s21, 0
      %p42 = por %p40, %p41
      %p43 = scmp.ne.s32.totalorder %s29, %s30
      %p44 = scmp.eq.s32.totalorder %s22, 1
      %p45 = por %p43, %p44
      %p47 = scmp.ne.s32.totalorder %s30, %s46
      %p48 = scmp.eq.s32.totalorder %s22, 0
      %p49 = por %p47, %p48
      %s51 = sadd.s32 %s50, 1
      %p54 = scmp.eq.s32.totalorder %s16, 1
      %p55 = scmp.ne.s32.totalorder %s50, %s52
      %p56 = scmp.eq.s32.totalorder %s16, 0
      %p57 = por %p55, %p56
      %p58 = scmp.ne.s32.totalorder %s50, %s52
      %p59 = scmp.eq.s32.totalorder %s21, 1
      %p60 = por %p58, %p59
      %p61 = scmp.ne.s32.totalorder %s52, %s53
      %p62 = scmp.eq.s32.totalorder %s21, 0
      %p63 = por %p61, %p62
      %p64 = scmp.ne.s32.totalorder %s52, %s53
      %p65 = scmp.eq.s32.totalorder %s22, 1
      %p66 = por %p64, %p65
      %p68 = scmp.ne.s32.totalorder %s53, %s67
      %p69 = scmp.eq.s32.totalorder %s22, 0
      %p70 = por %p68, %p69
      %s72 = sadd.s32 %s71, 1
      %p75 = scmp.eq.s32.totalorder %s16, 1
      %p76 = scmp.ne.s32.totalorder %s71, %s73
      %p77 = scmp.eq.s32.totalorder %s16, 0
      %p78 = por %p76, %p77
      %p79 = scmp.ne.s32.totalorder %s71, %s73
      %p80 = scmp.eq.s32.totalorder %s21, 1
      %p81 = por %p79, %p80
      %p82 = scmp.ne.s32.totalorder %s73, %s74
      %p83 = scmp.eq.s32.totalorder %s21, 0
      %p84 = por %p82, %p83
      %p85 = scmp.ne.s32.totalorder %s73, %s74
      %p86 = scmp.eq.s32.totalorder %s22, 1
      %p87 = por %p85, %p86
      %p89 = scmp.ne.s32.totalorder %s74, %s88
      %p90 = scmp.eq.s32.totalorder %s22, 0
      %p91 = por %p89, %p90
      %s92 = ssub.s32 %s16, %s23
      %p93 = scmp.eq.s32.totalorder %s92, 0
      %s95 = sadd.s32 %s94, 1
      %s96 = scalar_select %p93, %s94, %s95
      %p99 = pneg %p93
      %p100 = scmp.eq.s32.totalorder %s16, 1
      %p101 = por %p99, %p100
      %p102 = scmp.ne.s32.totalorder %s94, %s97
      %p103 = scmp.eq.s32.totalorder %s16, 0
      %p104 = por %p102, %p103
      %p105 = scmp.ne.s32.totalorder %s94, %s97
      %p106 = scmp.eq.s32.totalorder %s21, 1
      %p107 = por %p105, %p106
      %p108 = scmp.ne.s32.totalorder %s97, %s98
      %p109 = scmp.eq.s32.totalorder %s21, 0
      %p110 = por %p108, %p109
      %p111 = scmp.ne.s32.totalorder %s97, %s98
      %p112 = scmp.eq.s32.totalorder %s22, 1
      %p113 = por %p111, %p112
      %p115 = scmp.ne.s32.totalorder %s98, %s114
      %p116 = scmp.eq.s32.totalorder %s22, 0
      %p117 = por %p115, %p116
      %p118 = scmp.le.s32.totalorder 1, %s16
      %p119 = scmp.lt.s32.totalorder %s16, 3
      %p120 = pnand %p118, %p119
      %p121 = pneg %p120
      // Predicated region
      $region9: #{tpu_custom_call.1} parent=5 // pred_check
        _
      $region10: #{tpu_custom_call.1} parent=5 // pred_check_branch
        %123 = sbr.rel (%p120) target = $region12
      $region11: #{tpu_custom_call.1} parent=5 // pred_region
        %s124 = ssub.s32 %s16, 1
        // Predicated region
        $region13: #{tpu_custom_call.1} parent=11 // pred_check
          %p125 = pneg %p63
        $region14: #{tpu_custom_call.1} parent=11 // pred_check_branch
          %127 = sbr.rel (%p125) target = $region16
        $region15: #{tpu_custom_call.1} parent=11 // pred_region
          %s129 = ssub.s32 64, 64
          %130 = vsyncadd [#allocation8], %s129
          %s132 = sshll.u32 [#allocation7], 4
          %s133 = int_to_ptr.vmem [resolvable:$true] %s132
          %135 = dma.hbm_to_vmem [thread:$0]  %s1, 64, %s133, [#allocation8]
        $region16: #{tpu_custom_call.1} parent=11 // pred_fallthru
          _
        // Predicated region
        $region17: #{tpu_custom_call.1} parent=11 // pred_check
          %p136 = pneg %p84
        $region18: #{tpu_custom_call.1} parent=11 // pred_check_branch
          %138 = sbr.rel (%p136) target = $region20
        $region19: #{tpu_custom_call.1} parent=11 // pred_region
          %s140 = ssub.s32 4096, 4096
          %141 = vsyncadd [#allocation8], %s140
          %s142 = sshll.u32 [#allocation9], 4
          %s143 = int_to_ptr.vmem [resolvable:$true] %s142
          %148 = dma.hbm_to_vmem [thread:$0]  %s2, 4096, %s143, [#allocation8], 128, 128, 8
        $region20: #{tpu_custom_call.1} parent=11 // pred_fallthru
          _
      $region12: #{tpu_custom_call.1} parent=5 // pred_fallthru
        _
      %p149 = scmp.lt.s32.totalorder %s16, 2
      // Predicated region
      $region21: #{tpu_custom_call.1} parent=5 // pred_check
        %p150 = pneg %p149
      $region22: #{tpu_custom_call.1} parent=5 // pred_check_branch
        %152 = sbr.rel (%p150) target = $region24
      $region23: #{tpu_custom_call.1} parent=5 // pred_region
        // Predicated region
        $region25: #{tpu_custom_call.1} parent=23 // pred_check
          %p153 = pneg %p36
        $region26: #{tpu_custom_call.1} parent=23 // pred_check_branch
          %155 = sbr.rel (%p153) target = $region28
        $region27: #{tpu_custom_call.1} parent=23 // pred_region
          %s156 = sand.u32 %s26, 1
          %s157 = scalar_lea.sflag [#allocation5], %s156
          %s158 = sand.u32 %s26, 1
          %s159 = smul.addr %s158, 32
          %s160 = scalar_lea.vmem [#allocation4], %s159
          %s161 = smul.u32 2, %s16
          %s163 = ssub.s32 512, 512
          %164 = vsyncadd %s157, %s163
          %s165 = smul.addr %s161, 64
          %s166 = scalar_lea.hbm %s0, %s165
          %s167 = sshll.u32 %s160, 4
          %s168 = int_to_ptr.vmem [resolvable:$true] %s167
          %173 = dma.hbm_to_vmem [thread:$0]  %s166, 512, %s168, %s157, 256, 128, 8
        $region28: #{tpu_custom_call.1} parent=23 // pred_fallthru
          _
      $region24: #{tpu_custom_call.1} parent=5 // pred_fallthru
        _
      %p174 = scmp.le.s32.totalorder 1, %s16
      %p175 = scmp.lt.s32.totalorder %s16, 3
      %p176 = pnand %p174, %p175
      %p177 = pneg %p176
      // Predicated region
      $region29: #{tpu_custom_call.1} parent=5 // pred_check
        _
      $region30: #{tpu_custom_call.1} parent=5 // pred_check_branch
        %179 = sbr.rel (%p176) target = $region32
      $region31: #{tpu_custom_call.1} parent=5 // pred_region
        %s180 = ssub.s32 %s16, 1
        %s181 = sand.u32 %s29, 1
        %s182 = scalar_lea.sflag [#allocation5], %s181
        %s183 = sand.u32 %s29, 1
        %s184 = smul.addr %s183, 32
        %s185 = scalar_lea.vmem [#allocation4], %s184
        // Predicated region
        $region33: #{tpu_custom_call.1} parent=31 // pred_check
          %p186 = pneg %p42
        $region34: #{tpu_custom_call.1} parent=31 // pred_check_branch
          %188 = sbr.rel (%p186) target = $region36
        $region35: #{tpu_custom_call.1} parent=31 // pred_region
          %189 = dma.done %s182, 512
        $region36: #{tpu_custom_call.1} parent=31 // pred_fallthru
          _
        // Predicated region
        $region37: #{tpu_custom_call.1} parent=31 // pred_check
          %p190 = pneg %p63
        $region38: #{tpu_custom_call.1} parent=31 // pred_check_branch
          %192 = sbr.rel (%p190) target = $region40
        $region39: #{tpu_custom_call.1} parent=31 // pred_region
          %193 = dma.done [#allocation8], 64
        $region40: #{tpu_custom_call.1} parent=31 // pred_fallthru
          _
        // Predicated region
        $region41: #{tpu_custom_call.1} parent=31 // pred_check
          %p194 = pneg %p84
        $region42: #{tpu_custom_call.1} parent=31 // pred_check_branch
          %196 = sbr.rel (%p194) target = $region44
        $region43: #{tpu_custom_call.1} parent=31 // pred_region
          %197 = dma.done [#allocation8], 4096
        $region44: #{tpu_custom_call.1} parent=31 // pred_fallthru
          _
        %s198 = sand.u32 %s29, 1
        %s199 = scalar_lea.sflag [#allocation5], %s198
        %s200 = sand.u32 %s29, 1
        %s201 = smul.addr %s200, 32
        %s202 = scalar_lea.vmem [#allocation4], %s201
        %p203 = pneg %p42
        %p204 = pneg %p39
        %p205 = pneg %p63
        %p206 = pneg %p60
        %p207 = pneg %p84
        %p208 = pneg %p81
        %p209 = pneg %p110
        %p210 = pneg %p107
        %s211 = sand.u32 %s97, 1
        %s212 = scalar_lea.sflag [#allocation6], %s211
        %s213 = sand.u32 %s97, 1
        %s214 = smul.addr %s213, 16
        %s215 = scalar_lea.vmem [#allocation10], %s214
        %s216 = smul.u32 2, %s21
        %s217 = smul.u32 2, %s21
        %v219 = vld [vmem:[#allocation7] sm:$0xf]
        %v220 = vld [vmem:[%s185] sm:$0xff]
        %v221 = vld [vmem:[%s185 + $0x8] sm:$0xff]
        %v222 = vld [vmem:[%s185 + $0x10] sm:$0xff]
        %v223 = vld [vmem:[%s185 + $0x18] sm:$0xff]
        %v228 = vunpack.c.l.b16 %v220
        %v229 = vunpack.c.h.b16 %v220
        %v230 = vunpack.c.l.b16 %v221
        %v231 = vunpack.c.h.b16 %v221
        %v232 = vunpack.c.l.b16 %v222
        %v233 = vunpack.c.h.b16 %v222
        %v234 = vunpack.c.l.b16 %v223
        %v235 = vunpack.c.h.b16 %v223
        %v236 = vpack.c.b16 %v230, %v228
        %v237 = vpack.c.b16 %v231, %v229
        %v238 = vpack.c.b16 %v234, %v232
        %v239 = vpack.c.b16 %v235, %v233
        %vm244 = vcmask 261120
        %v246 = vsel %vm244, %v219, 0
        %248 = vmatprep.subr.bf16.mxu0 %v237
        %249 = vmatpush1.bf16.msra.mxu0 %v236
        %250 = vmatprep.subr.bf16.mxu0 %v239
        %251 = vmatpush1.bf16.msra.mxu0 %v238
        %252 = vmatprep.subr.bf16.mxu0 0
        %253 = vmatpush1.bf16.msra.mxu0 0
        %254 = vmatprep.subr.bf16.mxu0 0
        %255 = vmatpush1.bf16.msra.mxu0 0
        %256 = vmatprep.subr.bf16.mxu0 0
        %257 = vmatpush1.bf16.msra.mxu0 0
        %258 = vmatprep.subr.bf16.mxu0 0
        %259 = vmatpush1.bf16.msra.mxu0 0
        %260 = vmatprep.subr.bf16.mxu0 0
        %261 = vmatpush1.bf16.msra.mxu0 0
        %262 = vmatprep.subr.bf16.mxu0 0
        %263 = vmatpush1.bf16.msra.mxu0 0
        %264 = vmatprep.subr.bf16.mxu0 0
        %265 = vmatpush1.bf16.msra.mxu0 0
        %266 = vmatprep.subr.bf16.mxu0 0
        %267 = vmatpush1.bf16.msra.mxu0 0
        %268 = vmatprep.subr.bf16.mxu0 0
        %269 = vmatpush1.bf16.msra.mxu0 0
        %270 = vmatprep.subr.bf16.mxu0 0
        %271 = vmatpush1.bf16.msra.mxu0 0
        %272 = vmatprep.subr.bf16.mxu0 0
        %273 = vmatpush1.bf16.msra.mxu0 0
        %274 = vmatprep.subr.bf16.mxu0 0
        %275 = vmatpush1.bf16.msra.mxu0 0
        %276 = vmatprep.subr.bf16.mxu0 0
        %277 = vmatpush1.bf16.msra.mxu0 0
        %278 = vmatprep.subr.bf16.mxu0 0
        %279 = vmatpush1.bf16.msra.mxu0 0
        %280 = vmatprep.mubr.bf16.mxu0 0
        %281 = vmatmul.mubr.bf16.gmra.mrb[0].mxu0 %v246
        %v282 = vpop.f32.mrb[0].mxu0
        %v283 = vadd.f32 0.0, %v282
        %v284 = vpop.f32.mrb[0].mxu0
        %v285 = vadd.f32 0.0, %v284
        %v286 = vpop.f32.mrb[0].mxu0
        %v287 = vpop.f32.mrb[0].mxu0
        %288 = vdwg.mxu0
        %289 = vst [vmem:[#allocation2] sm:$0xff] %v283
        %290 = vst [vmem:[#allocation2 + $0x8] sm:$0xff] %v285
        %v291 = vld [vmem:[#allocation2] sm:$0xff]
        %v292 = vld [vmem:[#allocation2 + $0x8] sm:$0xff]
        %vm293 = vcmp.gt.f32.partialorder %v291, 1.0
        %vm294 = vcmp.gt.f32.partialorder %v292, 1.0
        %v295 = vsub.f32 %v291, 1.0
        %v296 = vsub.f32 %v292, 1.0
        %vm297 = vcmp.lt.f32.partialorder %v291, -1.0
        %vm298 = vcmp.lt.f32.partialorder %v292, -1.0
        %v299 = vadd.f32 %v291, 1.0
        %v300 = vadd.f32 %v292, 1.0
        %v301 = vsel %vm297, %v299, 0.0
        %v302 = vsel %vm298, %v300, 0.0
        %v303 = vsel %vm293, %v295, %v301
        %v304 = vsel %vm294, %v296, %v302
        %305 = vst [vmem:[#allocation3] sm:$0xff] %v303
        %306 = vst [vmem:[#allocation3 + $0x8] sm:$0xff] %v304
        %v307 = vmax.f32 %v303, 0.0
        %v308 = vmax.f32 %v304, 0.0
        %309 = vst [vmem:[#allocation3 + $0x10] sm:$0xff] %v307
        %310 = vst [vmem:[#allocation3 + $0x18] sm:$0xff] %v308
        %v311 = vld [vmem:[#allocation3] sm:$0xff]
        %v312 = vld [vmem:[#allocation3 + $0x8] sm:$0xff]
        %v313 = vld [vmem:[#allocation3 + $0x10] sm:$0xff]
        %v314 = vld [vmem:[#allocation3 + $0x18] sm:$0xff]
        %v315 = vld [vmem:[#allocation9] sm:$0xff]
        %v316 = vld [vmem:[#allocation9 + $0x8] sm:$0xff]
        %v317 = vld [vmem:[#allocation9 + $0x10] sm:$0xff]
        %v318 = vld [vmem:[#allocation9 + $0x18] sm:$0xff]
        %v319 = vld [vmem:[#allocation9 + $0x20] sm:$0xff]
        %v320 = vld [vmem:[#allocation9 + $0x28] sm:$0xff]
        %v321 = vld [vmem:[#allocation9 + $0x30] sm:$0xff]
        %v322 = vld [vmem:[#allocation9 + $0x38] sm:$0xff]
        %v323 = vld [vmem:[#allocation9 + $0x40] sm:$0xff]
        %v324 = vld [vmem:[#allocation9 + $0x48] sm:$0xff]
        %v325 = vld [vmem:[#allocation9 + $0x50] sm:$0xff]
        %v326 = vld [vmem:[#allocation9 + $0x58] sm:$0xff]
        %v327 = vld [vmem:[#allocation9 + $0x60] sm:$0xff]
        %v328 = vld [vmem:[#allocation9 + $0x68] sm:$0xff]
        %v329 = vld [vmem:[#allocation9 + $0x70] sm:$0xff]
        %v330 = vld [vmem:[#allocation9 + $0x78] sm:$0xff]
        %v331 = vld [vmem:[#allocation9 + $0x80] sm:$0xff]
        %v332 = vld [vmem:[#allocation9 + $0x88] sm:$0xff]
        %v333 = vld [vmem:[#allocation9 + $0x90] sm:$0xff]
        %v334 = vld [vmem:[#allocation9 + $0x98] sm:$0xff]
        %v335 = vld [vmem:[#allocation9 + $0xa0] sm:$0xff]
        %v336 = vld [vmem:[#allocation9 + $0xa8] sm:$0xff]
        %v337 = vld [vmem:[#allocation9 + $0xb0] sm:$0xff]
        %v338 = vld [vmem:[#allocation9 + $0xb8] sm:$0xff]
        %v339 = vld [vmem:[#allocation9 + $0xc0] sm:$0xff]
        %v340 = vld [vmem:[#allocation9 + $0xc8] sm:$0xff]
        %v341 = vld [vmem:[#allocation9 + $0xd0] sm:$0xff]
        %v342 = vld [vmem:[#allocation9 + $0xd8] sm:$0xff]
        %v343 = vld [vmem:[#allocation9 + $0xe0] sm:$0xff]
        %v344 = vld [vmem:[#allocation9 + $0xe8] sm:$0xff]
        %v345 = vld [vmem:[#allocation9 + $0xf0] sm:$0xff]
        %v346 = vld [vmem:[#allocation9 + $0xf8] sm:$0xff]
        %347 = vmatprep.subr.mxu0 0.0
        %348 = vmatpush1.msra.mxu0 %v315
        %349 = vmatprep.subr.mxu0 0.0
        %350 = vmatpush1.msra.mxu0 %v316
        %351 = vmatprep.subr.mxu0 0.0
        %352 = vmatpush1.msra.mxu0 %v317
        %353 = vmatprep.subr.mxu0 0.0
        %354 = vmatpush1.msra.mxu0 %v318
        %355 = vmatprep.subr.mxu0 0.0
        %356 = vmatpush1.msra.mxu0 %v319
        %357 = vmatprep.subr.mxu0 0.0
        %358 = vmatpush1.msra.mxu0 %v320
        %359 = vmatprep.subr.mxu0 0.0
        %360 = vmatpush1.msra.mxu0 %v321
        %361 = vmatprep.subr.mxu0 0.0
        %362 = vmatpush1.msra.mxu0 %v322
        %363 = vmatprep.subr.mxu0 0.0
        %364 = vmatpush1.msra.mxu0 %v323
        %365 = vmatprep.subr.mxu0 0.0
        %366 = vmatpush1.msra.mxu0 %v324
        %367 = vmatprep.subr.mxu0 0.0
        %368 = vmatpush1.msra.mxu0 %v325
        %369 = vmatprep.subr.mxu0 0.0
        %370 = vmatpush1.msra.mxu0 %v326
        %371 = vmatprep.subr.mxu0 0.0
        %372 = vmatpush1.msra.mxu0 %v327
        %373 = vmatprep.subr.mxu0 0.0
        %374 = vmatpush1.msra.mxu0 %v328
        %375 = vmatprep.subr.mxu0 0.0
        %376 = vmatpush1.msra.mxu0 %v329
        %377 = vmatprep.subr.mxu0 0.0
        %378 = vmatpush1.msra.mxu0 %v330
        %379 = vmatprep.subr.mxu0 0.0
        %380 = vmatpush1.msra.mxu0 %v331
        %381 = vmatprep.subr.mxu0 0.0
        %382 = vmatpush1.msra.mxu0 %v332
        %383 = vmatprep.subr.mxu0 0.0
        %384 = vmatpush1.msra.mxu0 %v333
        %385 = vmatprep.subr.mxu0 0.0
        %386 = vmatpush1.msra.mxu0 %v334
        %387 = vmatprep.subr.mxu0 0.0
        %388 = vmatpush1.msra.mxu0 %v335
        %389 = vmatprep.subr.mxu0 0.0
        %390 = vmatpush1.msra.mxu0 %v336
        %391 = vmatprep.subr.mxu0 0.0
        %392 = vmatpush1.msra.mxu0 %v337
        %393 = vmatprep.subr.mxu0 0.0
        %394 = vmatpush1.msra.mxu0 %v338
        %395 = vmatprep.subr.mxu0 0.0
        %396 = vmatpush1.msra.mxu0 %v339
        %397 = vmatprep.subr.mxu0 0.0
        %398 = vmatpush1.msra.mxu0 %v340
        %399 = vmatprep.subr.mxu0 0.0
        %400 = vmatpush1.msra.mxu0 %v341
        %401 = vmatprep.subr.mxu0 0.0
        %402 = vmatpush1.msra.mxu0 %v342
        %403 = vmatprep.subr.mxu0 0.0
        %404 = vmatpush1.msra.mxu0 %v343
        %405 = vmatprep.subr.mxu0 0.0
        %406 = vmatpush1.msra.mxu0 %v344
        %407 = vmatprep.subr.mxu0 0.0
        %408 = vmatpush1.msra.mxu0 %v345
        %409 = vmatprep.subr.mxu0 0.0
        %410 = vmatpush1.msra.mxu0 %v346
        %411 = vmatprep.mubr.f32.mxu0 %v312
        %412 = vmatmul.mubr.f32.gmra.mrb[0].mxu0 %v311
        %v413 = vpop.f32.mrb[0].mxu0
        %v414 = vadd.f32 0.0, %v413
        %v415 = vpop.f32.mrb[0].mxu0
        %416 = vmatprep.mubr.f32.mxu0 %v314
        %417 = vmatmul.mubr.f32.gmra.mrb[0].mxu0 %v313
        %v418 = vpop.f32.mrb[0].mxu0
        %v419 = vadd.f32 0.0, %v418
        %v420 = vpop.f32.mrb[0].mxu0
        %421 = vdwg.mxu0
        %422 = vst [vmem:[%s215] sm:$0xff] %v414
        %423 = vst [vmem:[%s215 + $0x8] sm:$0xff] %v419
        %s424 = sand.u32 %s97, 1
        %s425 = scalar_lea.sflag [#allocation6], %s424
        %s426 = sand.u32 %s97, 1
        %s427 = smul.addr %s426, 16
        %s428 = scalar_lea.vmem [#allocation10], %s427
        // Predicated region
        $region45: #{tpu_custom_call.1} parent=31 // pred_check
          %p429 = pneg %p107
        $region46: #{tpu_custom_call.1} parent=31 // pred_check_branch
          %431 = sbr.rel (%p429) target = $region48
        $region47: #{tpu_custom_call.1} parent=31 // pred_region
          %s432 = smul.u32 2, %s21
          %s434 = ssub.s32 256, 256
          %435 = vsyncadd %s425, %s434
          %s436 = smul.addr %s432, 128
          %s437 = scalar_lea.hbm %s3, %s436
          %s438 = sshll.u32 %s428, 4
          %s439 = int_to_ptr.vmem [resolvable:$true] %s438
          %444 = dma.vmem_to_hbm [thread:$0]  %s439, 256, %s437, %s425, 128, 128, 8
        $region48: #{tpu_custom_call.1} parent=31 // pred_fallthru
          _
      $region32: #{tpu_custom_call.1} parent=5 // pred_fallthru
        _
      %p445 = scmp.le.s32.totalorder 2, %s16
      // Predicated region
      $region49: #{tpu_custom_call.1} parent=5 // pred_check
        %p446 = pneg %p445
      $region50: #{tpu_custom_call.1} parent=5 // pred_check_branch
        %448 = sbr.rel (%p446) target = $region52
      $region51: #{tpu_custom_call.1} parent=5 // pred_region
        %s449 = ssub.s32 %s16, 2
        // Predicated region
        $region53: #{tpu_custom_call.1} parent=51 // pred_check
          %p450 = pneg %p113
        $region54: #{tpu_custom_call.1} parent=51 // pred_check_branch
          %452 = sbr.rel (%p450) target = $region56
        $region55: #{tpu_custom_call.1} parent=51 // pred_region
          %s453 = sand.u32 %s98, 1
          %s454 = scalar_lea.sflag [#allocation6], %s453
          %s455 = sand.u32 %s98, 1
          %s456 = smul.addr %s455, 16
          %s457 = scalar_lea.vmem [#allocation10], %s456
          %458 = dma.done %s454, 256
        $region56: #{tpu_custom_call.1} parent=51 // pred_fallthru
          _
      $region52: #{tpu_custom_call.1} parent=5 // pred_fallthru
        _
    $region6: #{tpu_custom_call.1} parent=1 // loop_footer
      %s20 = sadd.s32 1, %s16
    $region7: #{tpu_custom_call.1} parent=1 // loop_footer_branch
      %15 = sbr.rel target = $region3
    $region8: #{tpu_custom_call.1} parent=1 // loop_exit
      _
    %459 = vsyncpa [#allocation5], 1
    %s460 = scalar_lea.sflag [#allocation5], 1
    %461 = vsyncpa %s460, 1
    %462 = vsyncpa [#allocation8], 1
    %463 = vsyncpa [#allocation6], 1
    %s464 = scalar_lea.sflag [#allocation6], 1
    %465 = vsyncpa %s464, 1

</llo_original>
